<compile_context>
chip_gen: v7x
topology: tpu7x:2x2x1
jax: 0.10.0
libtpu: 0.0.40
codegen_flags: <defaults>
</compile_context>

<pallas_src>
import functools

import jax
import jax.numpy as jnp
from jax.experimental import pallas as pl
from jax.experimental.pallas import tpu as pltpu

_LANE = 128
_SUBLANE = 8


def _round_up(n, m):
    return (n + m - 1) // m * m


def _pad_to(a, shape):
    pads = [(0, t - s) for s, t in zip(a.shape, shape)]
    return jnp.pad(a, pads)


def _actor_critic_kernel(x_ref, wc1_ref, bc1_ref, wc2_ref, bc2_ref,
                         wa1_ref, ba1_ref, wa2_ref, ba2_ref,
                         value_ref, probs_ref, *, output_dim):
    """One batch tile: fused critic + actor heads.

    x_ref    (TB, Din_pad)  bf16
    w*_ref   bf16 weights, resident across the batch grid
    b*_ref   (1, N) f32 biases
    value_ref (TB, 128)     f32 -- column 0 holds the value
    probs_ref (TB, Dout_pad) f32 -- first `output_dim` columns hold the probs
    """
    x = x_ref[...]  # bf16 MXU operand

    # ---- critic head: relu(x @ Wc1 + bc1) @ Wc2 + bc2 ----
    hc = jnp.dot(x, wc1_ref[...], preferred_element_type=jnp.float32)
    hc = jnp.maximum(hc + bc1_ref[...], 0.0)
    v = jnp.dot(hc.astype(jnp.bfloat16), wc2_ref[...],
                preferred_element_type=jnp.float32)
    value_ref[...] = v + bc2_ref[...]

    # ---- actor head: softmax(relu(x @ Wa1 + ba1) @ Wa2 + ba2, dim=1) ----
    ha = jnp.dot(x, wa1_ref[...], preferred_element_type=jnp.float32)
    ha = jnp.maximum(ha + ba1_ref[...], 0.0)
    logits = jnp.dot(ha.astype(jnp.bfloat16), wa2_ref[...],
                     preferred_element_type=jnp.float32)
    logits = logits + ba2_ref[...]

    # Mask zero-padded output lanes so they take no softmax mass.
    lane = jax.lax.broadcasted_iota(jnp.int32, logits.shape, 1)
    logits = jnp.where(lane < output_dim, logits, -jnp.inf)

    m = jnp.max(logits, axis=-1, keepdims=True)
    e = jnp.exp(logits - m)                      # exp(-inf) == 0 on padded lanes
    denom = jnp.sum(e, axis=-1, keepdims=True)
    probs_ref[...] = e * pl.reciprocal(denom, approx=True)


@jax.jit
def actor_critic_softmax(x, wc1, bc1, wc2, bc2, wa1, ba1, wa2, ba2):
    """Returns (value, probs) exactly like ActorCriticSoftmax.forward.

    x   : (B, input_dim) f32
    wc1 : (input_dim, Hc)  bc1 : (Hc,)
    wc2 : (Hc, 1)          bc2 : (1,)
    wa1 : (input_dim, Ha)  ba1 : (Ha,)
    wa2 : (Ha, output_dim) ba2 : (output_dim,)
    """
    batch, input_dim = x.shape
    hc_dim = wc1.shape[1]
    ha_dim = wa1.shape[1]
    output_dim = wa2.shape[1]

    din_p = _round_up(input_dim, _LANE)
    hc_p = _round_up(hc_dim, _LANE)
    ha_p = _round_up(ha_dim, _LANE)
    dout_p = _round_up(output_dim, _LANE)
    val_p = _LANE

    # Batch tiling: up to 256 rows per tile (MXU height on v6e/v7x); shrink the
    # tile for tiny batches so an 8-row call isn't padded to 256 rows.
    tb = min(256, _round_up(batch, _SUBLANE))
    b_p = _round_up(batch, tb)
    n_tiles = b_p // tb

    # Wrapper-side zero padding + bf16 cast for the matmul operands.
    x_p = _pad_to(x, (b_p, din_p)).astype(jnp.bfloat16)
    wc1_p = _pad_to(wc1, (din_p, hc_p)).astype(jnp.bfloat16)
    wc2_p = _pad_to(wc2, (hc_p, val_p)).astype(jnp.bfloat16)
    wa1_p = _pad_to(wa1, (din_p, ha_p)).astype(jnp.bfloat16)
    wa2_p = _pad_to(wa2, (ha_p, dout_p)).astype(jnp.bfloat16)
    # Biases stay f32, as lane-aligned (1, N) rows.
    bc1_p = _pad_to(bc1.reshape(1, -1), (1, hc_p)).astype(jnp.float32)
    bc2_p = _pad_to(bc2.reshape(1, -1), (1, val_p)).astype(jnp.float32)
    ba1_p = _pad_to(ba1.reshape(1, -1), (1, ha_p)).astype(jnp.float32)
    ba2_p = _pad_to(ba2.reshape(1, -1), (1, dout_p)).astype(jnp.float32)

    # Full-extent, grid-independent block -> weights DMA'd once and held
    # resident in VMEM across all batch tiles.
    resident = lambda a: pl.BlockSpec(a.shape, lambda i: (0,) * a.ndim)

    value_p, probs_p = pl.pallas_call(
        functools.partial(_actor_critic_kernel, output_dim=output_dim),
        out_shape=(jax.ShapeDtypeStruct((b_p, val_p), jnp.float32),
                   jax.ShapeDtypeStruct((b_p, dout_p), jnp.float32)),
        grid_spec=pltpu.PrefetchScalarGridSpec(
            num_scalar_prefetch=0,
            grid=(n_tiles,),
            in_specs=[
                pl.BlockSpec((tb, din_p), lambda i: (i, 0)),   # x batch tile
                resident(wc1_p), resident(bc1_p),
                resident(wc2_p), resident(bc2_p),
                resident(wa1_p), resident(ba1_p),
                resident(wa2_p), resident(ba2_p),
            ],
            out_specs=[
                pl.BlockSpec((tb, val_p), lambda i: (i, 0)),
                pl.BlockSpec((tb, dout_p), lambda i: (i, 0)),
            ],
        ),
        compiler_params=pltpu.CompilerParams(
            dimension_semantics=("parallel",)),   # megacore on v7x
    )(x_p, wc1_p, bc1_p, wc2_p, bc2_p, wa1_p, ba1_p, wa2_p, ba2_p)

    value = value_p[:batch, :1]
    probs = probs_p[:batch, :output_dim]
    return value, probs


def init_params(key, input_dim, output_dim,
                actor_hidden_dim=256, critic_hidden_dim=256):
    """PyTorch nn.Linear-style init: U(-1/sqrt(fan_in), 1/sqrt(fan_in))."""
    def linear(k, fan_in, fan_out):
        kw, kb = jax.random.split(k)
        bound = 1.0 / jnp.sqrt(jnp.float32(fan_in))
        w = jax.random.uniform(kw, (fan_in, fan_out), jnp.float32, -bound, bound)
        b = jax.random.uniform(kb, (fan_out,), jnp.float32, -bound, bound)
        return w, b

    k1, k2, k3, k4 = jax.random.split(key, 4)
    wc1, bc1 = linear(k1, input_dim, critic_hidden_dim)
    wc2, bc2 = linear(k2, critic_hidden_dim, 1)
    wa1, ba1 = linear(k3, input_dim, actor_hidden_dim)
    wa2, ba2 = linear(k4, actor_hidden_dim, output_dim)
    return wc1, bc1, wc2, bc2, wa1, ba1, wa2, ba2


if __name__ == "__main__":
    batch, input_dim, output_dim = 8, 32, 8

    key = jax.random.PRNGKey(0)
    kx, kp = jax.random.split(key)
    x = jax.random.normal(kx, (batch, input_dim), jnp.float32)
    params = init_params(kp, input_dim, output_dim)

    value, probs = actor_critic_softmax(x, *params)
    value, probs = jax.block_until_ready((value, probs))

    assert value.shape == (batch, 1)
    assert probs.shape == (batch, output_dim)

    # softmax rows sum to ~1 (approx reciprocal -> relaxed tolerance)
    row_sums = jnp.sum(probs, axis=1)
    assert jnp.allclose(row_sums, 1.0, atol=3e-3), row_sums

    # pure-JAX reference with matching bf16 matmul operands / f32 accumulation
    wc1, bc1, wc2, bc2, wa1, ba1, wa2, ba2 = params

    def mm(a, w):
        return jnp.dot(a.astype(jnp.bfloat16), w.astype(jnp.bfloat16),
                       preferred_element_type=jnp.float32)

    hc = jnp.maximum(mm(x, wc1) + bc1, 0.0)
    v_ref = mm(hc, wc2) + bc2
    ha = jnp.maximum(mm(x, wa1) + ba1, 0.0)
    p_ref = jax.nn.softmax(mm(ha, wa2) + ba2, axis=1)

    assert jnp.allclose(value, v_ref.reshape(batch, 1), atol=5e-3, rtol=5e-3)
    assert jnp.allclose(probs, p_ref, atol=5e-3, rtol=5e-3)

    print("KERNEL_OK")
</pallas_src>

<mosaic_0001>
module attributes {stable_mosaic.version = 11 : i64} {
  func.func @_actor_critic_kernel(%arg0: i32, %arg1: memref<8x128xbf16, #tpu.memory_space<vmem>>, %arg2: memref<128x256xbf16, #tpu.memory_space<vmem>>, %arg3: memref<1x256xf32, #tpu.memory_space<vmem>>, %arg4: memref<256x128xbf16, #tpu.memory_space<vmem>>, %arg5: memref<1x128xf32, #tpu.memory_space<vmem>>, %arg6: memref<128x256xbf16, #tpu.memory_space<vmem>>, %arg7: memref<1x256xf32, #tpu.memory_space<vmem>>, %arg8: memref<256x128xbf16, #tpu.memory_space<vmem>>, %arg9: memref<1x128xf32, #tpu.memory_space<vmem>>, %arg10: memref<8x128xf32, #tpu.memory_space<vmem>>, %arg11: memref<8x128xf32, #tpu.memory_space<vmem>>) attributes {dimension_semantics = [#tpu.dimension_semantics<parallel>], iteration_bounds = array<i64: 1>, scalar_prefetch = 0 : i64, scratch_operands = 0 : i64, tpu.core_type = #tpu.core_type<tc>, window_params = [{transform_indices = @transform_0, window_bounds = array<i64: 8, 128>}, {pipeline_mode = #tpu.pipeline_mode<synchronous>, transform_indices = @transform_1, window_bounds = array<i64: 128, 256>}, {pipeline_mode = #tpu.pipeline_mode<synchronous>, transform_indices = @transform_2, window_bounds = array<i64: 1, 256>}, {pipeline_mode = #tpu.pipeline_mode<synchronous>, transform_indices = @transform_3, window_bounds = array<i64: 256, 128>}, {pipeline_mode = #tpu.pipeline_mode<synchronous>, transform_indices = @transform_4, window_bounds = array<i64: 1, 128>}, {pipeline_mode = #tpu.pipeline_mode<synchronous>, transform_indices = @transform_5, window_bounds = array<i64: 128, 256>}, {pipeline_mode = #tpu.pipeline_mode<synchronous>, transform_indices = @transform_6, window_bounds = array<i64: 1, 256>}, {pipeline_mode = #tpu.pipeline_mode<synchronous>, transform_indices = @transform_7, window_bounds = array<i64: 256, 128>}, {pipeline_mode = #tpu.pipeline_mode<synchronous>, transform_indices = @transform_8, window_bounds = array<i64: 1, 128>}, {transform_indices = @transform_9, window_bounds = array<i64: 8, 128>}, {transform_indices = @transform_10, window_bounds = array<i64: 8, 128>}]} {
    %c0 = arith.constant 0 : index
    %c0_0 = arith.constant 0 : index
    %0 = vector.load %arg1[%c0, %c0_0] : memref<8x128xbf16, #tpu.memory_space<vmem>>, vector<8x128xbf16>
    %c0_1 = arith.constant 0 : index
    %c0_2 = arith.constant 0 : index
    %1 = vector.load %arg2[%c0_1, %c0_2] : memref<128x256xbf16, #tpu.memory_space<vmem>>, vector<128x256xbf16>
    %cst = arith.constant dense<0.000000e+00> : vector<8x256xf32>
    %2 = tpu.matmul %0, %1, %cst {dimension_numbers = #tpu.dot_dimension_numbers<[1], [0], [0], [1], [0, 0, 1, 1], [], []>} : vector<8x128xbf16>, vector<128x256xbf16>, vector<8x256xf32> -> vector<8x256xf32>
    %c0_3 = arith.constant 0 : index
    %c0_4 = arith.constant 0 : index
    %3 = vector.load %arg3[%c0_3, %c0_4] : memref<1x256xf32, #tpu.memory_space<vmem>>, vector<1x256xf32>
    %4 = vector.broadcast %3 : vector<1x256xf32> to vector<8x256xf32>
    %5 = arith.addf %2, %4 : vector<8x256xf32>
    %cst_5 = arith.constant 0.000000e+00 : f32
    %6 = vector.broadcast %cst_5 : f32 to vector<8x256xf32>
    %7 = arith.maximumf %5, %6 : vector<8x256xf32>
    %8 = arith.truncf %7 : vector<8x256xf32> to vector<8x256xbf16>
    %c0_6 = arith.constant 0 : index
    %c0_7 = arith.constant 0 : index
    %9 = vector.load %arg4[%c0_6, %c0_7] : memref<256x128xbf16, #tpu.memory_space<vmem>>, vector<256x128xbf16>
    %cst_8 = arith.constant dense<0.000000e+00> : vector<8x128xf32>
    %10 = tpu.matmul %8, %9, %cst_8 {dimension_numbers = #tpu.dot_dimension_numbers<[1], [0], [0], [1], [0, 0, 1, 1], [], []>} : vector<8x256xbf16>, vector<256x128xbf16>, vector<8x128xf32> -> vector<8x128xf32>
    %c0_9 = arith.constant 0 : index
    %c0_10 = arith.constant 0 : index
    %11 = vector.load %arg5[%c0_9, %c0_10] : memref<1x128xf32, #tpu.memory_space<vmem>>, vector<1x128xf32>
    %12 = vector.broadcast %11 : vector<1x128xf32> to vector<8x128xf32>
    %13 = arith.addf %10, %12 : vector<8x128xf32>
    %c0_11 = arith.constant 0 : index
    %c0_12 = arith.constant 0 : index
    %14 = vector.load %arg10[%c0_11, %c0_12] : memref<8x128xf32, #tpu.memory_space<vmem>>, vector<8x128xf32>
    tpu.vector_store %arg10[%c0_11, %c0_12], %13 {strides = array<i32>} : memref<8x128xf32, #tpu.memory_space<vmem>>, vector<8x128xf32>,
    %c0_13 = arith.constant 0 : index
    %c0_14 = arith.constant 0 : index
    %15 = vector.load %arg6[%c0_13, %c0_14] : memref<128x256xbf16, #tpu.memory_space<vmem>>, vector<128x256xbf16>
    %cst_15 = arith.constant dense<0.000000e+00> : vector<8x256xf32>
    %16 = tpu.matmul %0, %15, %cst_15 {dimension_numbers = #tpu.dot_dimension_numbers<[1], [0], [0], [1], [0, 0, 1, 1], [], []>} : vector<8x128xbf16>, vector<128x256xbf16>, vector<8x256xf32> -> vector<8x256xf32>
    %c0_16 = arith.constant 0 : index
    %c0_17 = arith.constant 0 : index
    %17 = vector.load %arg7[%c0_16, %c0_17] : memref<1x256xf32, #tpu.memory_space<vmem>>, vector<1x256xf32>
    %18 = vector.broadcast %17 : vector<1x256xf32> to vector<8x256xf32>
    %19 = arith.addf %16, %18 : vector<8x256xf32>
    %cst_18 = arith.constant 0.000000e+00 : f32
    %20 = vector.broadcast %cst_18 : f32 to vector<8x256xf32>
    %21 = arith.maximumf %19, %20 : vector<8x256xf32>
    %22 = arith.truncf %21 : vector<8x256xf32> to vector<8x256xbf16>
    %c0_19 = arith.constant 0 : index
    %c0_20 = arith.constant 0 : index
    %23 = vector.load %arg8[%c0_19, %c0_20] : memref<256x128xbf16, #tpu.memory_space<vmem>>, vector<256x128xbf16>
    %cst_21 = arith.constant dense<0.000000e+00> : vector<8x128xf32>
    %24 = tpu.matmul %22, %23, %cst_21 {dimension_numbers = #tpu.dot_dimension_numbers<[1], [0], [0], [1], [0, 0, 1, 1], [], []>} : vector<8x256xbf16>, vector<256x128xbf16>, vector<8x128xf32> -> vector<8x128xf32>
    %c0_22 = arith.constant 0 : index
    %c0_23 = arith.constant 0 : index
    %25 = vector.load %arg9[%c0_22, %c0_23] : memref<1x128xf32, #tpu.memory_space<vmem>>, vector<1x128xf32>
    %26 = vector.broadcast %25 : vector<1x128xf32> to vector<8x128xf32>
    %27 = arith.addf %24, %26 : vector<8x128xf32>
    %28 = tpu.iota {dimensions = array<i32: 1>} : vector<8x128xi32>
    %c8_i32 = arith.constant 8 : i32
    %29 = vector.broadcast %c8_i32 : i32 to vector<8x128xi32>
    %30 = arith.cmpi slt, %28, %29 : vector<8x128xi32>
    %cst_24 = arith.constant 0xFF800000 : f32
    %31 = vector.broadcast %cst_24 : f32 to vector<8x128xf32>
    %32 = arith.select %30, %27, %31 : vector<8x128xi1>, vector<8x128xf32>
    %cst_25 = arith.constant dense<0xFF800000> : vector<8xf32>
    %33 = vector.multi_reduction <maximumf>, %32, %cst_25 [1] : vector<8x128xf32> to vector<8xf32>
    %34 = vector.shape_cast %33 : vector<8xf32> to vector<8x1xf32>
    %35 = vector.broadcast %34 : vector<8x1xf32> to vector<8x128xf32>
    %36 = arith.subf %32, %35 : vector<8x128xf32>
    %37 = math.exp %36 : vector<8x128xf32>
    %cst_26 = arith.constant dense<0.000000e+00> : vector<8xf32>
    %38 = vector.multi_reduction <add>, %37, %cst_26 [1] : vector<8x128xf32> to vector<8xf32>
    %39 = vector.shape_cast %38 : vector<8xf32> to vector<8x1xf32>
    %40 = tpu.reciprocal %39 {approx = true} : vector<8x1xf32> -> vector<8x1xf32>
    %41 = vector.broadcast %40 : vector<8x1xf32> to vector<8x128xf32>
    %42 = arith.mulf %37, %41 : vector<8x128xf32>
    %c0_27 = arith.constant 0 : index
    %c0_28 = arith.constant 0 : index
    %43 = vector.load %arg11[%c0_27, %c0_28] : memref<8x128xf32, #tpu.memory_space<vmem>>, vector<8x128xf32>
    tpu.vector_store %arg11[%c0_27, %c0_28], %42 {strides = array<i32>} : memref<8x128xf32, #tpu.memory_space<vmem>>, vector<8x128xf32>,
    return
  }
  func.func @transform_0(%arg0: i32) -> (i32, i32) {
    %c0_i32 = arith.constant 0 : i32
    %c0_i32_0 = arith.constant 0 : i32
    return %arg0, %c0_i32 : i32, i32
  }
  func.func @transform_1(%arg0: i32) -> (i32, i32) {
    %c0_i32 = arith.constant 0 : i32
    %c0_i32_0 = arith.constant 0 : i32
    %c0_i32_1 = arith.constant 0 : i32
    return %c0_i32, %c0_i32_0 : i32, i32
  }
  func.func @transform_2(%arg0: i32) -> (i32, i32) {
    %c0_i32 = arith.constant 0 : i32
    %c0_i32_0 = arith.constant 0 : i32
    %c0_i32_1 = arith.constant 0 : i32
    return %c0_i32, %c0_i32_0 : i32, i32
  }
  func.func @transform_3(%arg0: i32) -> (i32, i32) {
    %c0_i32 = arith.constant 0 : i32
    %c0_i32_0 = arith.constant 0 : i32
    %c0_i32_1 = arith.constant 0 : i32
    return %c0_i32, %c0_i32_0 : i32, i32
  }
  func.func @transform_4(%arg0: i32) -> (i32, i32) {
    %c0_i32 = arith.constant 0 : i32
    %c0_i32_0 = arith.constant 0 : i32
    %c0_i32_1 = arith.constant 0 : i32
    return %c0_i32, %c0_i32_0 : i32, i32
  }
  func.func @transform_5(%arg0: i32) -> (i32, i32) {
    %c0_i32 = arith.constant 0 : i32
    %c0_i32_0 = arith.constant 0 : i32
    %c0_i32_1 = arith.constant 0 : i32
    return %c0_i32, %c0_i32_0 : i32, i32
  }
  func.func @transform_6(%arg0: i32) -> (i32, i32) {
    %c0_i32 = arith.constant 0 : i32
    %c0_i32_0 = arith.constant 0 : i32
    %c0_i32_1 = arith.constant 0 : i32
    return %c0_i32, %c0_i32_0 : i32, i32
  }
  func.func @transform_7(%arg0: i32) -> (i32, i32) {
    %c0_i32 = arith.constant 0 : i32
    %c0_i32_0 = arith.constant 0 : i32
    %c0_i32_1 = arith.constant 0 : i32
    return %c0_i32, %c0_i32_0 : i32, i32
  }
  func.func @transform_8(%arg0: i32) -> (i32, i32) {
    %c0_i32 = arith.constant 0 : i32
    %c0_i32_0 = arith.constant 0 : i32
    %c0_i32_1 = arith.constant 0 : i32
    return %c0_i32, %c0_i32_0 : i32, i32
  }
  func.func @transform_9(%arg0: i32) -> (i32, i32) {
    %c0_i32 = arith.constant 0 : i32
    %c0_i32_0 = arith.constant 0 : i32
    return %arg0, %c0_i32 : i32, i32
  }
  func.func @transform_10(%arg0: i32) -> (i32, i32) {
    %c0_i32 = arith.constant 0 : i32
    %c0_i32_0 = arith.constant 0 : i32
    return %arg0, %c0_i32 : i32, i32
  }
}

</mosaic_0001>

<llo_original>
// kernel: actor_critic_softmax.1
$region0: #{actor_critic_softmax.1}
  #allocation0 [shape = 'u32[]', space=smem, size = 0x4, offset = 0x4, fixed_abs, tag = 'smem constant byte address 0x4 - core index']
  #allocation1 [shape = 'u32[144,128]{1,0:T(1,128)}', space=vmem, size = 0x12000, scoped, tag = 'internal scratch']
  %s0 = inlined_call_operand.vmem [shape: bf16[8,128], index: 0, kind: input, shape index: {}]
  %s1 = inlined_call_operand.vmem [shape: bf16[128,256], index: 1, kind: input, shape index: {}]
  %s2 = inlined_call_operand.vmem [shape: f32[1,256], index: 2, kind: input, shape index: {}]
  %s3 = inlined_call_operand.vmem [shape: bf16[256,128], index: 3, kind: input, shape index: {}]
  %s4 = inlined_call_operand.vmem [shape: f32[1,128], index: 4, kind: input, shape index: {}]
  %s5 = inlined_call_operand.vmem [shape: bf16[128,256], index: 5, kind: input, shape index: {}]
  %s6 = inlined_call_operand.vmem [shape: f32[1,256], index: 6, kind: input, shape index: {}]
  %s7 = inlined_call_operand.vmem [shape: bf16[256,128], index: 7, kind: input, shape index: {}]
  %s8 = inlined_call_operand.vmem [shape: f32[1,128], index: 8, kind: input, shape index: {}]
  %s9 = inlined_call_operand.vmem [shape: f32[8,128], index: 9, kind: output, shape index: {0}]
  %s10 = inlined_call_operand.hbm [shape: f32[8,128], index: 10, kind: output, shape index: {1}]
  %11 = xla_tuple %s9, %s10
  %s12 = sld [smem:[#allocation0]]
  $region54: #{actor_critic_softmax.1} parent=0
    _
  %s14 = ssub.s32 1, %s12
  %s15 = scalar_select 0, %s14, %s12
  $region1: #{actor_critic_softmax.1} parent=0
    #allocation2 [shape = 'u8[4096]{0}', space=vmem, size = 0x1000, scoped, tag = 'output window, operand 1, single buffered']
    #allocation3 [shape = 's32[1]{0}', space=sflag, size = 0x4, scoped, tag = 'scoped memory for actor_critic_softmax.1']
    %16 = vsyncpa [#allocation3], 0
    // Predicated region
    $region2: #{actor_critic_softmax.1} parent=1 // pred_check
      _
    $region3: #{actor_critic_softmax.1} parent=1 // pred_check_branch
      %18 = sbr.rel (0) target = $region5
    $region4: #{actor_critic_softmax.1} parent=1 // pred_region
      _
    $region5: #{actor_critic_softmax.1} parent=1 // pred_fallthru
      _
    // Predicated region
    $region6: #{actor_critic_softmax.1} parent=1 // pred_check
      _
    $region7: #{actor_critic_softmax.1} parent=1 // pred_check_branch
      %20 = sbr.rel (0) target = $region9
    $region8: #{actor_critic_softmax.1} parent=1 // pred_region
      _
    $region9: #{actor_critic_softmax.1} parent=1 // pred_fallthru
      _
    // Predicated region
    $region10: #{actor_critic_softmax.1} parent=1 // pred_check
      _
    $region11: #{actor_critic_softmax.1} parent=1 // pred_check_branch
      %22 = sbr.rel (0) target = $region13
    $region12: #{actor_critic_softmax.1} parent=1 // pred_region
      _
    $region13: #{actor_critic_softmax.1} parent=1 // pred_fallthru
      _
    // Predicated region
    $region14: #{actor_critic_softmax.1} parent=1 // pred_check
      _
    $region15: #{actor_critic_softmax.1} parent=1 // pred_check_branch
      %24 = sbr.rel (0) target = $region17
    $region16: #{actor_critic_softmax.1} parent=1 // pred_region
      _
    $region17: #{actor_critic_softmax.1} parent=1 // pred_fallthru
      _
    // Predicated region
    $region18: #{actor_critic_softmax.1} parent=1 // pred_check
      _
    $region19: #{actor_critic_softmax.1} parent=1 // pred_check_branch
      %26 = sbr.rel (0) target = $region21
    $region20: #{actor_critic_softmax.1} parent=1 // pred_region
      _
    $region21: #{actor_critic_softmax.1} parent=1 // pred_fallthru
      _
    // Predicated region
    $region22: #{actor_critic_softmax.1} parent=1 // pred_check
      _
    $region23: #{actor_critic_softmax.1} parent=1 // pred_check_branch
      %28 = sbr.rel (0) target = $region25
    $region24: #{actor_critic_softmax.1} parent=1 // pred_region
      _
    $region25: #{actor_critic_softmax.1} parent=1 // pred_fallthru
      _
    // Predicated region
    $region26: #{actor_critic_softmax.1} parent=1 // pred_check
      _
    $region27: #{actor_critic_softmax.1} parent=1 // pred_check_branch
      %30 = sbr.rel (0) target = $region29
    $region28: #{actor_critic_softmax.1} parent=1 // pred_region
      _
    $region29: #{actor_critic_softmax.1} parent=1 // pred_fallthru
      _
    // Predicated region
    $region30: #{actor_critic_softmax.1} parent=1 // pred_check
      _
    $region31: #{actor_critic_softmax.1} parent=1 // pred_check_branch
      %32 = sbr.rel (0) target = $region33
    $region32: #{actor_critic_softmax.1} parent=1 // pred_region
      _
    $region33: #{actor_critic_softmax.1} parent=1 // pred_fallthru
      _
    // Predicated region
    $region34: #{actor_critic_softmax.1} parent=1 // pred_check
      _
    $region35: #{actor_critic_softmax.1} parent=1 // pred_check_branch
      %34 = sbr.rel (0) target = $region37
    $region36: #{actor_critic_softmax.1} parent=1 // pred_region
      _
    $region37: #{actor_critic_softmax.1} parent=1 // pred_fallthru
      _
    %v36 = vld [vmem:[%s0] sm:$0xf]
    %v37 = vld [vmem:[%s1] sm:$0xff]
    %v38 = vld [vmem:[%s1 + $0x8] sm:$0xff]
    %v39 = vld [vmem:[%s1 + $0x10] sm:$0xff]
    %v40 = vld [vmem:[%s1 + $0x18] sm:$0xff]
    %v41 = vld [vmem:[%s1 + $0x20] sm:$0xff]
    %v42 = vld [vmem:[%s1 + $0x28] sm:$0xff]
    %v43 = vld [vmem:[%s1 + $0x30] sm:$0xff]
    %v44 = vld [vmem:[%s1 + $0x38] sm:$0xff]
    %v45 = vld [vmem:[%s1 + $0x40] sm:$0xff]
    %v46 = vld [vmem:[%s1 + $0x48] sm:$0xff]
    %v47 = vld [vmem:[%s1 + $0x50] sm:$0xff]
    %v48 = vld [vmem:[%s1 + $0x58] sm:$0xff]
    %v49 = vld [vmem:[%s1 + $0x60] sm:$0xff]
    %v50 = vld [vmem:[%s1 + $0x68] sm:$0xff]
    %v51 = vld [vmem:[%s1 + $0x70] sm:$0xff]
    %v52 = vld [vmem:[%s1 + $0x78] sm:$0xff]
    %v53 = vld [vmem:[%s2] sm:$0x3]
    %v55 = vlaneseq
    %v56 = vshrl.u32 %v55, 7
    %v57 = vsub.s32 0, %v56
    %v58 = vrot.slane %v53, %v57
    %v59 = vlaneseq
    %v60 = vshrl.u32 %v59, 7
    %v61 = vsub.s32 1, %v60
    %v62 = vrot.slane %v53, %v61
    %v81 = vunpack.c.l.b16 %v37
    %v82 = vunpack.c.h.b16 %v37
    %v83 = vunpack.c.l.b16 %v38
    %v84 = vunpack.c.h.b16 %v38
    %v85 = vunpack.c.l.b16 %v39
    %v86 = vunpack.c.h.b16 %v39
    %v87 = vunpack.c.l.b16 %v40
    %v88 = vunpack.c.h.b16 %v40
    %v89 = vunpack.c.l.b16 %v41
    %v90 = vunpack.c.h.b16 %v41
    %v91 = vunpack.c.l.b16 %v42
    %v92 = vunpack.c.h.b16 %v42
    %v93 = vunpack.c.l.b16 %v43
    %v94 = vunpack.c.h.b16 %v43
    %v95 = vunpack.c.l.b16 %v44
    %v96 = vunpack.c.h.b16 %v44
    %v97 = vunpack.c.l.b16 %v45
    %v98 = vunpack.c.h.b16 %v45
    %v99 = vunpack.c.l.b16 %v46
    %v100 = vunpack.c.h.b16 %v46
    %v101 = vunpack.c.l.b16 %v47
    %v102 = vunpack.c.h.b16 %v47
    %v103 = vunpack.c.l.b16 %v48
    %v104 = vunpack.c.h.b16 %v48
    %v105 = vunpack.c.l.b16 %v49
    %v106 = vunpack.c.h.b16 %v49
    %v107 = vunpack.c.l.b16 %v50
    %v108 = vunpack.c.h.b16 %v50
    %v109 = vunpack.c.l.b16 %v51
    %v110 = vunpack.c.h.b16 %v51
    %v111 = vunpack.c.l.b16 %v52
    %v112 = vunpack.c.h.b16 %v52
    %v113 = vpack.c.b16 %v83, %v81
    %v114 = vpack.c.b16 %v84, %v82
    %v115 = vpack.c.b16 %v87, %v85
    %v116 = vpack.c.b16 %v88, %v86
    %v117 = vpack.c.b16 %v91, %v89
    %v118 = vpack.c.b16 %v92, %v90
    %v119 = vpack.c.b16 %v95, %v93
    %v120 = vpack.c.b16 %v96, %v94
    %v121 = vpack.c.b16 %v99, %v97
    %v122 = vpack.c.b16 %v100, %v98
    %v123 = vpack.c.b16 %v103, %v101
    %v124 = vpack.c.b16 %v104, %v102
    %v125 = vpack.c.b16 %v107, %v105
    %v126 = vpack.c.b16 %v108, %v106
    %v127 = vpack.c.b16 %v111, %v109
    %v128 = vpack.c.b16 %v112, %v110
    %145 = vmatprep.subr.bf16.mxu0 %v114
    %146 = vmatpush1.bf16.msra.mxu0 %v113
    %147 = vmatprep.subr.bf16.mxu0 %v116
    %148 = vmatpush1.bf16.msra.mxu0 %v115
    %149 = vmatprep.subr.bf16.mxu0 %v118
    %150 = vmatpush1.bf16.msra.mxu0 %v117
    %151 = vmatprep.subr.bf16.mxu0 %v120
    %152 = vmatpush1.bf16.msra.mxu0 %v119
    %153 = vmatprep.subr.bf16.mxu0 %v122
    %154 = vmatpush1.bf16.msra.mxu0 %v121
    %155 = vmatprep.subr.bf16.mxu0 %v124
    %156 = vmatpush1.bf16.msra.mxu0 %v123
    %157 = vmatprep.subr.bf16.mxu0 %v126
    %158 = vmatpush1.bf16.msra.mxu0 %v125
    %159 = vmatprep.subr.bf16.mxu0 %v128
    %160 = vmatpush1.bf16.msra.mxu0 %v127
    %161 = vmatprep.subr.bf16.mxu0 0
    %162 = vmatpush1.bf16.msra.mxu0 0
    %163 = vmatprep.subr.bf16.mxu0 0
    %164 = vmatpush1.bf16.msra.mxu0 0
    %165 = vmatprep.subr.bf16.mxu0 0
    %166 = vmatpush1.bf16.msra.mxu0 0
    %167 = vmatprep.subr.bf16.mxu0 0
    %168 = vmatpush1.bf16.msra.mxu0 0
    %169 = vmatprep.subr.bf16.mxu0 0
    %170 = vmatpush1.bf16.msra.mxu0 0
    %171 = vmatprep.subr.bf16.mxu0 0
    %172 = vmatpush1.bf16.msra.mxu0 0
    %173 = vmatprep.subr.bf16.mxu0 0
    %174 = vmatpush1.bf16.msra.mxu0 0
    %175 = vmatprep.subr.bf16.mxu0 0
    %176 = vmatpush1.bf16.msra.mxu0 0
    %177 = vmatprep.mubr.bf16.mxu0 0
    %178 = vmatmul.mubr.bf16.gmra.mrb[0].mxu0 %v36
    %v179 = vpop.f32.mrb[0].mxu0
    %v180 = vadd.f32 %v58, %v179
    %v181 = vpop.f32.mrb[0].mxu0
    %v182 = vadd.f32 %v62, %v181
    %v183 = vpop.f32.mrb[0].mxu0
    %v184 = vpop.f32.mrb[0].mxu0
    %185 = vdwg.mxu0
    %v186 = vmax.f32 %v180, 0.0
    %v187 = vmax.f32 %v182, 0.0
    %v188 = vpack.c.bf16 %v186, %v186
    %v189 = vpack.c.bf16 %v187, %v187
    %v190 = vld [vmem:[%s3] sm:$0xf]
    %v191 = vld [vmem:[%s3 + $0x4] sm:$0xf]
    %v192 = vld [vmem:[%s3 + $0x8] sm:$0xf]
    %v193 = vld [vmem:[%s3 + $0xc] sm:$0xf]
    %v194 = vld [vmem:[%s3 + $0x10] sm:$0xf]
    %v195 = vld [vmem:[%s3 + $0x14] sm:$0xf]
    %v196 = vld [vmem:[%s3 + $0x18] sm:$0xf]
    %v197 = vld [vmem:[%s3 + $0x1c] sm:$0xf]
    %v198 = vld [vmem:[%s3 + $0x20] sm:$0xf]
    %v199 = vld [vmem:[%s3 + $0x24] sm:$0xf]
    %v200 = vld [vmem:[%s3 + $0x28] sm:$0xf]
    %v201 = vld [vmem:[%s3 + $0x2c] sm:$0xf]
    %v202 = vld [vmem:[%s3 + $0x30] sm:$0xf]
    %v203 = vld [vmem:[%s3 + $0x34] sm:$0xf]
    %v204 = vld [vmem:[%s3 + $0x38] sm:$0xf]
    %v205 = vld [vmem:[%s3 + $0x3c] sm:$0xf]
    %v206 = vld [vmem:[%s3 + $0x40] sm:$0xf]
    %v207 = vld [vmem:[%s3 + $0x44] sm:$0xf]
    %v208 = vld [vmem:[%s3 + $0x48] sm:$0xf]
    %v209 = vld [vmem:[%s3 + $0x4c] sm:$0xf]
    %v210 = vld [vmem:[%s3 + $0x50] sm:$0xf]
    %v211 = vld [vmem:[%s3 + $0x54] sm:$0xf]
    %v212 = vld [vmem:[%s3 + $0x58] sm:$0xf]
    %v213 = vld [vmem:[%s3 + $0x5c] sm:$0xf]
    %v214 = vld [vmem:[%s3 + $0x60] sm:$0xf]
    %v215 = vld [vmem:[%s3 + $0x64] sm:$0xf]
    %v216 = vld [vmem:[%s3 + $0x68] sm:$0xf]
    %v217 = vld [vmem:[%s3 + $0x6c] sm:$0xf]
    %v218 = vld [vmem:[%s3 + $0x70] sm:$0xf]
    %v219 = vld [vmem:[%s3 + $0x74] sm:$0xf]
    %v220 = vld [vmem:[%s3 + $0x78] sm:$0xf]
    %v221 = vld [vmem:[%s3 + $0x7c] sm:$0xf]
    %v222 = vld [vmem:[%s4] sm:$0x1]
    %v224 = vlaneseq
    %v225 = vshrl.u32 %v224, 7
    %v226 = vsub.s32 0, %v225
    %v227 = vrot.slane %v222, %v226
    %v261 = vunpack.c.l.b16 %v190
    %v262 = vunpack.c.l.b16 %v191
    %v263 = vunpack.c.l.b16 %v192
    %v264 = vunpack.c.l.b16 %v193
    %v265 = vunpack.c.l.b16 %v194
    %v266 = vunpack.c.l.b16 %v195
    %v267 = vunpack.c.l.b16 %v196
    %v268 = vunpack.c.l.b16 %v197
    %v269 = vunpack.c.l.b16 %v198
    %v270 = vunpack.c.l.b16 %v199
    %v271 = vunpack.c.l.b16 %v200
    %v272 = vunpack.c.l.b16 %v201
    %v273 = vunpack.c.l.b16 %v202
    %v274 = vunpack.c.l.b16 %v203
    %v275 = vunpack.c.l.b16 %v204
    %v276 = vunpack.c.l.b16 %v205
    %v277 = vunpack.c.l.b16 %v206
    %v278 = vunpack.c.l.b16 %v207
    %v279 = vunpack.c.l.b16 %v208
    %v280 = vunpack.c.l.b16 %v209
    %v281 = vunpack.c.l.b16 %v210
    %v282 = vunpack.c.l.b16 %v211
    %v283 = vunpack.c.l.b16 %v212
    %v284 = vunpack.c.l.b16 %v213
    %v285 = vunpack.c.l.b16 %v214
    %v286 = vunpack.c.l.b16 %v215
    %v287 = vunpack.c.l.b16 %v216
    %v288 = vunpack.c.l.b16 %v217
    %v289 = vunpack.c.l.b16 %v218
    %v290 = vunpack.c.l.b16 %v219
    %v291 = vunpack.c.l.b16 %v220
    %v292 = vunpack.c.l.b16 %v221
    %v293 = vpack.c.b16 %v262, %v261
    %v294 = vpack.c.b16 %v264, %v263
    %v295 = vpack.c.b16 %v266, %v265
    %v296 = vpack.c.b16 %v268, %v267
    %v297 = vpack.c.b16 %v270, %v269
    %v298 = vpack.c.b16 %v272, %v271
    %v299 = vpack.c.b16 %v274, %v273
    %v300 = vpack.c.b16 %v276, %v275
    %v301 = vpack.c.b16 %v278, %v277
    %v302 = vpack.c.b16 %v280, %v279
    %v303 = vpack.c.b16 %v282, %v281
    %v304 = vpack.c.b16 %v284, %v283
    %v305 = vpack.c.b16 %v286, %v285
    %v306 = vpack.c.b16 %v288, %v287
    %v307 = vpack.c.b16 %v290, %v289
    %v308 = vpack.c.b16 %v292, %v291
    %325 = vmatprep.subr.bf16.mxu0 0
    %326 = vmatpush1.bf16.msra.mxu0 %v293
    %327 = vmatprep.subr.bf16.mxu0 0
    %328 = vmatpush1.bf16.msra.mxu0 %v294
    %329 = vmatprep.subr.bf16.mxu0 0
    %330 = vmatpush1.bf16.msra.mxu0 %v295
    %331 = vmatprep.subr.bf16.mxu0 0
    %332 = vmatpush1.bf16.msra.mxu0 %v296
    %333 = vmatprep.subr.bf16.mxu0 0
    %334 = vmatpush1.bf16.msra.mxu0 %v297
    %335 = vmatprep.subr.bf16.mxu0 0
    %336 = vmatpush1.bf16.msra.mxu0 %v298
    %337 = vmatprep.subr.bf16.mxu0 0
    %338 = vmatpush1.bf16.msra.mxu0 %v299
    %339 = vmatprep.subr.bf16.mxu0 0
    %340 = vmatpush1.bf16.msra.mxu0 %v300
    %341 = vmatprep.subr.bf16.mxu0 0
    %342 = vmatpush1.bf16.msra.mxu0 %v301
    %343 = vmatprep.subr.bf16.mxu0 0
    %344 = vmatpush1.bf16.msra.mxu0 %v302
    %345 = vmatprep.subr.bf16.mxu0 0
    %346 = vmatpush1.bf16.msra.mxu0 %v303
    %347 = vmatprep.subr.bf16.mxu0 0
    %348 = vmatpush1.bf16.msra.mxu0 %v304
    %349 = vmatprep.subr.bf16.mxu0 0
    %350 = vmatpush1.bf16.msra.mxu0 %v305
    %351 = vmatprep.subr.bf16.mxu0 0
    %352 = vmatpush1.bf16.msra.mxu0 %v306
    %353 = vmatprep.subr.bf16.mxu0 0
    %354 = vmatpush1.bf16.msra.mxu0 %v307
    %355 = vmatprep.subr.bf16.mxu0 0
    %356 = vmatpush1.bf16.msra.mxu0 %v308
    %357 = vmatprep.mubr.bf16.mxu0 %v189
    %358 = vmatmul.mubr.bf16.gmra.mrb[0].mxu0 %v188
    %v359 = vpop.f32.mrb[0].mxu0
    %v360 = vadd.f32 %v227, %v359
    %v361 = vpop.f32.mrb[0].mxu0
    %v362 = vpop.f32.mrb[0].mxu0
    %v363 = vpop.f32.mrb[0].mxu0
    %364 = vdwg.mxu0
    %365 = vst [vmem:[%s9] sm:$0xff] %v360
    %v366 = vld [vmem:[%s5] sm:$0xff]
    %v367 = vld [vmem:[%s5 + $0x8] sm:$0xff]
    %v368 = vld [vmem:[%s5 + $0x10] sm:$0xff]
    %v369 = vld [vmem:[%s5 + $0x18] sm:$0xff]
    %v370 = vld [vmem:[%s5 + $0x20] sm:$0xff]
    %v371 = vld [vmem:[%s5 + $0x28] sm:$0xff]
    %v372 = vld [vmem:[%s5 + $0x30] sm:$0xff]
    %v373 = vld [vmem:[%s5 + $0x38] sm:$0xff]
    %v374 = vld [vmem:[%s5 + $0x40] sm:$0xff]
    %v375 = vld [vmem:[%s5 + $0x48] sm:$0xff]
    %v376 = vld [vmem:[%s5 + $0x50] sm:$0xff]
    %v377 = vld [vmem:[%s5 + $0x58] sm:$0xff]
    %v378 = vld [vmem:[%s5 + $0x60] sm:$0xff]
    %v379 = vld [vmem:[%s5 + $0x68] sm:$0xff]
    %v380 = vld [vmem:[%s5 + $0x70] sm:$0xff]
    %v381 = vld [vmem:[%s5 + $0x78] sm:$0xff]
    %v382 = vld [vmem:[%s6] sm:$0x3]
    %v384 = vlaneseq
    %v385 = vshrl.u32 %v384, 7
    %v386 = vsub.s32 0, %v385
    %v387 = vrot.slane %v382, %v386
    %v388 = vlaneseq
    %v389 = vshrl.u32 %v388, 7
    %v390 = vsub.s32 1, %v389
    %v391 = vrot.slane %v382, %v390
    %v410 = vunpack.c.l.b16 %v366
    %v411 = vunpack.c.h.b16 %v366
    %v412 = vunpack.c.l.b16 %v367
    %v413 = vunpack.c.h.b16 %v367
    %v414 = vunpack.c.l.b16 %v368
    %v415 = vunpack.c.h.b16 %v368
    %v416 = vunpack.c.l.b16 %v369
    %v417 = vunpack.c.h.b16 %v369
    %v418 = vunpack.c.l.b16 %v370
    %v419 = vunpack.c.h.b16 %v370
    %v420 = vunpack.c.l.b16 %v371
    %v421 = vunpack.c.h.b16 %v371
    %v422 = vunpack.c.l.b16 %v372
    %v423 = vunpack.c.h.b16 %v372
    %v424 = vunpack.c.l.b16 %v373
    %v425 = vunpack.c.h.b16 %v373
    %v426 = vunpack.c.l.b16 %v374
    %v427 = vunpack.c.h.b16 %v374
    %v428 = vunpack.c.l.b16 %v375
    %v429 = vunpack.c.h.b16 %v375
    %v430 = vunpack.c.l.b16 %v376
    %v431 = vunpack.c.h.b16 %v376
    %v432 = vunpack.c.l.b16 %v377
    %v433 = vunpack.c.h.b16 %v377
    %v434 = vunpack.c.l.b16 %v378
    %v435 = vunpack.c.h.b16 %v378
    %v436 = vunpack.c.l.b16 %v379
    %v437 = vunpack.c.h.b16 %v379
    %v438 = vunpack.c.l.b16 %v380
    %v439 = vunpack.c.h.b16 %v380
    %v440 = vunpack.c.l.b16 %v381
    %v441 = vunpack.c.h.b16 %v381
    %v442 = vpack.c.b16 %v412, %v410
    %v443 = vpack.c.b16 %v413, %v411
    %v444 = vpack.c.b16 %v416, %v414
    %v445 = vpack.c.b16 %v417, %v415
    %v446 = vpack.c.b16 %v420, %v418
    %v447 = vpack.c.b16 %v421, %v419
    %v448 = vpack.c.b16 %v424, %v422
    %v449 = vpack.c.b16 %v425, %v423
    %v450 = vpack.c.b16 %v428, %v426
    %v451 = vpack.c.b16 %v429, %v427
    %v452 = vpack.c.b16 %v432, %v430
    %v453 = vpack.c.b16 %v433, %v431
    %v454 = vpack.c.b16 %v436, %v434
    %v455 = vpack.c.b16 %v437, %v435
    %v456 = vpack.c.b16 %v440, %v438
    %v457 = vpack.c.b16 %v441, %v439
    %474 = vmatprep.subr.bf16.mxu0 %v443
    %475 = vmatpush1.bf16.msra.mxu0 %v442
    %476 = vmatprep.subr.bf16.mxu0 %v445
    %477 = vmatpush1.bf16.msra.mxu0 %v444
    %478 = vmatprep.subr.bf16.mxu0 %v447
    %479 = vmatpush1.bf16.msra.mxu0 %v446
    %480 = vmatprep.subr.bf16.mxu0 %v449
    %481 = vmatpush1.bf16.msra.mxu0 %v448
    %482 = vmatprep.subr.bf16.mxu0 %v451
    %483 = vmatpush1.bf16.msra.mxu0 %v450
    %484 = vmatprep.subr.bf16.mxu0 %v453
    %485 = vmatpush1.bf16.msra.mxu0 %v452
    %486 = vmatprep.subr.bf16.mxu0 %v455
    %487 = vmatpush1.bf16.msra.mxu0 %v454
    %488 = vmatprep.subr.bf16.mxu0 %v457
    %489 = vmatpush1.bf16.msra.mxu0 %v456
    %490 = vmatprep.subr.bf16.mxu0 0
    %491 = vmatpush1.bf16.msra.mxu0 0
    %492 = vmatprep.subr.bf16.mxu0 0
    %493 = vmatpush1.bf16.msra.mxu0 0
    %494 = vmatprep.subr.bf16.mxu0 0
    %495 = vmatpush1.bf16.msra.mxu0 0
    %496 = vmatprep.subr.bf16.mxu0 0
    %497 = vmatpush1.bf16.msra.mxu0 0
    %498 = vmatprep.subr.bf16.mxu0 0
    %499 = vmatpush1.bf16.msra.mxu0 0
    %500 = vmatprep.subr.bf16.mxu0 0
    %501 = vmatpush1.bf16.msra.mxu0 0
    %502 = vmatprep.subr.bf16.mxu0 0
    %503 = vmatpush1.bf16.msra.mxu0 0
    %504 = vmatprep.subr.bf16.mxu0 0
    %505 = vmatpush1.bf16.msra.mxu0 0
    %506 = vmatprep.mubr.bf16.mxu0 0
    %507 = vmatmul.mubr.bf16.gmra.mrb[0].mxu0 %v36
    %v508 = vpop.f32.mrb[0].mxu0
    %v509 = vadd.f32 %v387, %v508
    %v510 = vpop.f32.mrb[0].mxu0
    %v511 = vadd.f32 %v391, %v510
    %v512 = vpop.f32.mrb[0].mxu0
    %v513 = vpop.f32.mrb[0].mxu0
    %514 = vdwg.mxu0
    %v515 = vmax.f32 %v509, 0.0
    %v516 = vmax.f32 %v511, 0.0
    %v517 = vpack.c.bf16 %v515, %v515
    %v518 = vpack.c.bf16 %v516, %v516
    %v519 = vld [vmem:[%s7] sm:$0xf]
    %v520 = vld [vmem:[%s7 + $0x4] sm:$0xf]
    %v521 = vld [vmem:[%s7 + $0x8] sm:$0xf]
    %v522 = vld [vmem:[%s7 + $0xc] sm:$0xf]
    %v523 = vld [vmem:[%s7 + $0x10] sm:$0xf]
    %v524 = vld [vmem:[%s7 + $0x14] sm:$0xf]
    %v525 = vld [vmem:[%s7 + $0x18] sm:$0xf]
    %v526 = vld [vmem:[%s7 + $0x1c] sm:$0xf]
    %v527 = vld [vmem:[%s7 + $0x20] sm:$0xf]
    %v528 = vld [vmem:[%s7 + $0x24] sm:$0xf]
    %v529 = vld [vmem:[%s7 + $0x28] sm:$0xf]
    %v530 = vld [vmem:[%s7 + $0x2c] sm:$0xf]
    %v531 = vld [vmem:[%s7 + $0x30] sm:$0xf]
    %v532 = vld [vmem:[%s7 + $0x34] sm:$0xf]
    %v533 = vld [vmem:[%s7 + $0x38] sm:$0xf]
    %v534 = vld [vmem:[%s7 + $0x3c] sm:$0xf]
    %v535 = vld [vmem:[%s7 + $0x40] sm:$0xf]
    %v536 = vld [vmem:[%s7 + $0x44] sm:$0xf]
    %v537 = vld [vmem:[%s7 + $0x48] sm:$0xf]
    %v538 = vld [vmem:[%s7 + $0x4c] sm:$0xf]
    %v539 = vld [vmem:[%s7 + $0x50] sm:$0xf]
    %v540 = vld [vmem:[%s7 + $0x54] sm:$0xf]
    %v541 = vld [vmem:[%s7 + $0x58] sm:$0xf]
    %v542 = vld [vmem:[%s7 + $0x5c] sm:$0xf]
    %v543 = vld [vmem:[%s7 + $0x60] sm:$0xf]
    %v544 = vld [vmem:[%s7 + $0x64] sm:$0xf]
    %v545 = vld [vmem:[%s7 + $0x68] sm:$0xf]
    %v546 = vld [vmem:[%s7 + $0x6c] sm:$0xf]
    %v547 = vld [vmem:[%s7 + $0x70] sm:$0xf]
    %v548 = vld [vmem:[%s7 + $0x74] sm:$0xf]
    %v549 = vld [vmem:[%s7 + $0x78] sm:$0xf]
    %v550 = vld [vmem:[%s7 + $0x7c] sm:$0xf]
    %v551 = vld [vmem:[%s8] sm:$0x1]
    %v553 = vlaneseq
    %v554 = vshrl.u32 %v553, 7
    %v555 = vsub.s32 0, %v554
    %v556 = vrot.slane %v551, %v555
    %v590 = vunpack.c.l.b16 %v519
    %v591 = vunpack.c.l.b16 %v520
    %v592 = vunpack.c.l.b16 %v521
    %v593 = vunpack.c.l.b16 %v522
    %v594 = vunpack.c.l.b16 %v523
    %v595 = vunpack.c.l.b16 %v524
    %v596 = vunpack.c.l.b16 %v525
    %v597 = vunpack.c.l.b16 %v526
    %v598 = vunpack.c.l.b16 %v527
    %v599 = vunpack.c.l.b16 %v528
    %v600 = vunpack.c.l.b16 %v529
    %v601 = vunpack.c.l.b16 %v530
    %v602 = vunpack.c.l.b16 %v531
    %v603 = vunpack.c.l.b16 %v532
    %v604 = vunpack.c.l.b16 %v533
    %v605 = vunpack.c.l.b16 %v534
    %v606 = vunpack.c.l.b16 %v535
    %v607 = vunpack.c.l.b16 %v536
    %v608 = vunpack.c.l.b16 %v537
    %v609 = vunpack.c.l.b16 %v538
    %v610 = vunpack.c.l.b16 %v539
    %v611 = vunpack.c.l.b16 %v540
    %v612 = vunpack.c.l.b16 %v541
    %v613 = vunpack.c.l.b16 %v542
    %v614 = vunpack.c.l.b16 %v543
    %v615 = vunpack.c.l.b16 %v544
    %v616 = vunpack.c.l.b16 %v545
    %v617 = vunpack.c.l.b16 %v546
    %v618 = vunpack.c.l.b16 %v547
    %v619 = vunpack.c.l.b16 %v548
    %v620 = vunpack.c.l.b16 %v549
    %v621 = vunpack.c.l.b16 %v550
    %v622 = vpack.c.b16 %v591, %v590
    %v623 = vpack.c.b16 %v593, %v592
    %v624 = vpack.c.b16 %v595, %v594
    %v625 = vpack.c.b16 %v597, %v596
    %v626 = vpack.c.b16 %v599, %v598
    %v627 = vpack.c.b16 %v601, %v600
    %v628 = vpack.c.b16 %v603, %v602
    %v629 = vpack.c.b16 %v605, %v604
    %v630 = vpack.c.b16 %v607, %v606
    %v631 = vpack.c.b16 %v609, %v608
    %v632 = vpack.c.b16 %v611, %v610
    %v633 = vpack.c.b16 %v613, %v612
    %v634 = vpack.c.b16 %v615, %v614
    %v635 = vpack.c.b16 %v617, %v616
    %v636 = vpack.c.b16 %v619, %v618
    %v637 = vpack.c.b16 %v621, %v620
    %654 = vmatprep.subr.bf16.mxu0 0
    %655 = vmatpush1.bf16.msra.mxu0 %v622
    %656 = vmatprep.subr.bf16.mxu0 0
    %657 = vmatpush1.bf16.msra.mxu0 %v623
    %658 = vmatprep.subr.bf16.mxu0 0
    %659 = vmatpush1.bf16.msra.mxu0 %v624
    %660 = vmatprep.subr.bf16.mxu0 0
    %661 = vmatpush1.bf16.msra.mxu0 %v625
    %662 = vmatprep.subr.bf16.mxu0 0
    %663 = vmatpush1.bf16.msra.mxu0 %v626
    %664 = vmatprep.subr.bf16.mxu0 0
    %665 = vmatpush1.bf16.msra.mxu0 %v627
    %666 = vmatprep.subr.bf16.mxu0 0
    %667 = vmatpush1.bf16.msra.mxu0 %v628
    %668 = vmatprep.subr.bf16.mxu0 0
    %669 = vmatpush1.bf16.msra.mxu0 %v629
    %670 = vmatprep.subr.bf16.mxu0 0
    %671 = vmatpush1.bf16.msra.mxu0 %v630
    %672 = vmatprep.subr.bf16.mxu0 0
    %673 = vmatpush1.bf16.msra.mxu0 %v631
    %674 = vmatprep.subr.bf16.mxu0 0
    %675 = vmatpush1.bf16.msra.mxu0 %v632
    %676 = vmatprep.subr.bf16.mxu0 0
    %677 = vmatpush1.bf16.msra.mxu0 %v633
    %678 = vmatprep.subr.bf16.mxu0 0
    %679 = vmatpush1.bf16.msra.mxu0 %v634
    %680 = vmatprep.subr.bf16.mxu0 0
    %681 = vmatpush1.bf16.msra.mxu0 %v635
    %682 = vmatprep.subr.bf16.mxu0 0
    %683 = vmatpush1.bf16.msra.mxu0 %v636
    %684 = vmatprep.subr.bf16.mxu0 0
    %685 = vmatpush1.bf16.msra.mxu0 %v637
    %686 = vmatprep.mubr.bf16.mxu0 %v518
    %687 = vmatmul.mubr.bf16.gmra.mrb[0].mxu0 %v517
    %v688 = vpop.f32.mrb[0].mxu0
    %v689 = vadd.f32 %v556, %v688
    %v690 = vpop.f32.mrb[0].mxu0
    %v691 = vpop.f32.mrb[0].mxu0
    %v692 = vpop.f32.mrb[0].mxu0
    %693 = vdwg.mxu0
    %v694 = vlaneseq
    %v695 = vand.u32 %v694, 127
    %vm696 = vcmp.lt.s32.totalorder %v695, 8
    %v697 = vsel %vm696, %v689, -inf
    %698 = vmax.xlane.f32.xlu0 %v697
    %v699 = vpop.xlane.xlu0 %698
    %v700 = vsub.f32 %v697, %v699
    %v701 = vmul.f32 %v700, 1.442695
    %v702 = vpow.pop %v701
    %703 = vadd.xlane.f32.xlu0 %v702
    %v704 = vpop.xlane.xlu0 %703
    %v705 = vrcp.pop %v704
    %v706 = vmul.f32 %v702, %v705
    %707 = vst [vmem:[#allocation2] sm:$0xff] %v706
    // Predicated region
    $region38: #{actor_critic_softmax.1} parent=1 // pred_check
      _
    $region39: #{actor_critic_softmax.1} parent=1 // pred_check_branch
      %709 = sbr.rel (0) target = $region41
    $region40: #{actor_critic_softmax.1} parent=1 // pred_region
      _
    $region41: #{actor_critic_softmax.1} parent=1 // pred_fallthru
      _
    // Predicated region
    $region42: #{actor_critic_softmax.1} parent=1 // pred_check
      _
    $region43: #{actor_critic_softmax.1} parent=1 // pred_check_branch
      %711 = sbr.rel (0) target = $region45
    $region44: #{actor_critic_softmax.1} parent=1 // pred_region
      %s713 = ssub.s32 128, 128
      %714 = vsyncadd [#allocation3], %s713
      %s716 = sshll.u32 [#allocation2], 4
      %s717 = int_to_ptr.vmem [resolvable:$true] %s716
      %719 = dma.vmem_to_hbm [thread:$0]  %s717, 128, %s10, [#allocation3]
    $region45: #{actor_critic_softmax.1} parent=1 // pred_fallthru
      _
    // Predicated region
    $region46: #{actor_critic_softmax.1} parent=1 // pred_check
      _
    $region47: #{actor_critic_softmax.1} parent=1 // pred_check_branch
      %721 = sbr.rel (0) target = $region49
    $region48: #{actor_critic_softmax.1} parent=1 // pred_region
      _
    $region49: #{actor_critic_softmax.1} parent=1 // pred_fallthru
      _
    // Predicated region
    $region50: #{actor_critic_softmax.1} parent=1 // pred_check
      _
    $region51: #{actor_critic_softmax.1} parent=1 // pred_check_branch
      %723 = sbr.rel (0) target = $region53
    $region52: #{actor_critic_softmax.1} parent=1 // pred_region
      %724 = dma.done [#allocation3], 128
    $region53: #{actor_critic_softmax.1} parent=1 // pred_fallthru
      _
    %725 = vsyncpa [#allocation3], 1

</llo_original>
